<compile_context>
chip_gen: v5e
topology: v5e:2x2
jax: 0.10.0
libtpu: 0.0.40
codegen_flags: <defaults>
</compile_context>

<pallas_src>
import functools

import jax
import jax.numpy as jnp
from jax.experimental import pallas as pl
from jax.experimental.pallas import tpu as pltpu

P_DROP = 0.4
D_IN = 784          # 28*28 flattened MNIST
H = 200             # hidden width of the PyTorch module
D_OUT = 10
HP = 256            # hidden padded to a lane-dense multiple of 128
OP = 128            # output padded to one full lane tile


def _round_up(x, m):
    return (x + m - 1) // m * m


def _make_kernel(training: bool):
    def kernel(x_ref, w1_ref, b1_ref, w2_ref, b2_ref, w3_ref, b3_ref, *rest):
        if training:
            m1_ref, m2_ref, o_ref = rest
        else:
            (o_ref,) = rest

        # Layer 1: Linear -> Dropout -> ReLU  (bf16 MXU matmul, f32 accumulate)
        h = jnp.dot(x_ref[...].astype(jnp.bfloat16), w1_ref[...],
                    preferred_element_type=jnp.float32) + b1_ref[...]
        if training:
            h = h * m1_ref[...]          # inverted-dropout mask {0, 1/keep}, f32
        h = jnp.maximum(h, 0.0)

        # Layer 2: Linear -> Dropout -> ReLU
        h = jnp.dot(h.astype(jnp.bfloat16), w2_ref[...],
                    preferred_element_type=jnp.float32) + b2_ref[...]
        if training:
            h = h * m2_ref[...]
        h = jnp.maximum(h, 0.0)

        # Layer 3: Linear
        o_ref[...] = jnp.dot(h.astype(jnp.bfloat16), w3_ref[...],
                             preferred_element_type=jnp.float32) + b3_ref[...]

    return kernel


@functools.partial(jax.jit, static_argnames=("training", "block_b"))
def net_forward(x, params, dropout_key=None, *, training=False, block_b=512):
    """Forward pass of `Net`.  x: (B, 784) float32 -> (B, 10) float32."""
    w1, b1, w2, b2, w3, b3 = params
    B = x.shape[0]

    # Batch tile: multiple of 8 sublanes, capped at block_b; batch zero-padded up.
    bt = min(block_b, _round_up(B, 8))
    padded_b = _round_up(B, bt)
    num_tiles = padded_b // bt

    # Lane-dense, bf16 weights (resident in VMEM across the whole grid); f32 biases.
    w1p = jnp.pad(w1, ((0, 0), (0, HP - H))).astype(jnp.bfloat16)
    b1p = jnp.pad(b1, ((0, 0), (0, HP - H))).astype(jnp.float32)
    w2p = jnp.pad(w2, ((0, HP - H), (0, HP - H))).astype(jnp.bfloat16)
    b2p = jnp.pad(b2, ((0, 0), (0, HP - H))).astype(jnp.float32)
    w3p = jnp.pad(w3, ((0, HP - H), (0, OP - D_OUT))).astype(jnp.bfloat16)
    b3p = jnp.pad(b3, ((0, 0), (0, OP - D_OUT))).astype(jnp.float32)

    xp = jnp.pad(x.astype(jnp.float32), ((0, padded_b - B), (0, 0)))

    inputs = [xp, w1p, b1p, w2p, b2p, w3p, b3p]
    in_specs = [
        pl.BlockSpec((bt, D_IN), lambda i: (i, 0)),    # x: tiled over batch
        pl.BlockSpec((D_IN, HP), lambda i: (0, 0)),    # weights/biases: resident
        pl.BlockSpec((1, HP), lambda i: (0, 0)),
        pl.BlockSpec((HP, HP), lambda i: (0, 0)),
        pl.BlockSpec((1, HP), lambda i: (0, 0)),
        pl.BlockSpec((HP, OP), lambda i: (0, 0)),
        pl.BlockSpec((1, OP), lambda i: (0, 0)),
    ]

    bytes_accessed = (xp.size * 4 + padded_b * OP * 4
                      + (w1p.size + w2p.size + w3p.size) * 2
                      + (b1p.size + b2p.size + b3p.size) * 4)

    if training:
        # TODO(synk): masks are generated host-side (jax.random) instead of with the
        # in-kernel TPU PRNG, so dropout is stochastic but portable (runs under
        # interpret mode too); it cannot reproduce PyTorch's RNG stream bit-for-bit.
        keep = 1.0 - P_DROP
        k1, k2 = jax.random.split(dropout_key)
        m1 = jax.random.bernoulli(k1, keep, (padded_b, HP)).astype(jnp.float32) / keep
        m2 = jax.random.bernoulli(k2, keep, (padded_b, HP)).astype(jnp.float32) / keep
        inputs += [m1, m2]
        in_specs += [pl.BlockSpec((bt, HP), lambda i: (i, 0)),
                     pl.BlockSpec((bt, HP), lambda i: (i, 0))]
        bytes_accessed += (m1.size + m2.size) * 4

    flops = 2 * padded_b * (D_IN * HP + HP * HP + HP * OP)

    out = pl.pallas_call(
        _make_kernel(training),
        out_shape=jax.ShapeDtypeStruct((padded_b, OP), jnp.float32),
        grid=(num_tiles,),
        in_specs=in_specs,
        out_specs=pl.BlockSpec((bt, OP), lambda i: (i, 0)),
        compiler_params=pltpu.CompilerParams(
            dimension_semantics=("parallel",),
            vmem_limit_bytes=64 * 1024 * 1024,
        ),
        cost_estimate=pl.CostEstimate(flops=flops, transcendentals=0,
                                      bytes_accessed=bytes_accessed),
    )(*inputs)

    return out[:B, :D_OUT]


def init_params(key):
    """Deterministic init matching nn.Linear's U(-1/sqrt(fan_in), 1/sqrt(fan_in)).

    Weights stored transposed as (in, out) so the kernel computes y = x @ W + b.
    """
    def linear(k, fan_in, fan_out):
        kw, kb = jax.random.split(k)
        bound = 1.0 / (fan_in ** 0.5)
        w = jax.random.uniform(kw, (fan_in, fan_out), jnp.float32, -bound, bound)
        b = jax.random.uniform(kb, (1, fan_out), jnp.float32, -bound, bound)
        return w, b

    k1, k2, k3 = jax.random.split(key, 3)
    w1, b1 = linear(k1, D_IN, H)
    w2, b2 = linear(k2, H, H)
    w3, b3 = linear(k3, H, D_OUT)
    return (w1, b1, w2, b2, w3, b3)


def reference_eval(x, params):
    """Pure-JAX eval-mode reference using the same bf16-matmul / f32-accumulate recipe."""
    w1, b1, w2, b2, w3, b3 = params

    def mm(a, w):
        return jnp.dot(a.astype(jnp.bfloat16), w.astype(jnp.bfloat16),
                       preferred_element_type=jnp.float32)

    h = jnp.maximum(mm(x, w1) + b1, 0.0)
    h = jnp.maximum(mm(h, w2) + b2, 0.0)
    return mm(h, w3) + b3


if __name__ == "__main__":
    key = jax.random.PRNGKey(0)
    kx, kp, kd = jax.random.split(key, 3)

    params = init_params(kp)

    # Small single-tile eval check.
    B = 8
    x = jax.random.normal(kx, (B, D_IN), dtype=jnp.float32)
    out_eval = jax.block_until_ready(net_forward(x, params, training=False))
    ref = reference_eval(x, params)
    assert out_eval.shape == (B, D_OUT)
    assert jnp.allclose(out_eval, ref, atol=2e-2, rtol=2e-2), "eval mismatch vs reference"

    # Multi-tile path (exercises batch grid + batch padding + output slicing).
    B2 = 272
    x2 = jax.random.normal(kx, (B2, D_IN), dtype=jnp.float32)
    out2 = jax.block_until_ready(net_forward(x2, params, training=False, block_b=128))
    ref2 = reference_eval(x2, params)
    assert out2.shape == (B2, D_OUT)
    assert jnp.allclose(out2, ref2, atol=2e-2, rtol=2e-2), "tiled eval mismatch vs reference"

    # Training mode: inverted dropout with host-generated masks applied inside the kernel.
    out_train = jax.block_until_ready(net_forward(x, params, kd, training=True))
    assert out_train.shape == (B, D_OUT)
    assert bool(jnp.all(jnp.isfinite(out_train)))

    print("KERNEL_OK")
</pallas_src>

<mosaic_0001>
module attributes {stable_mosaic.version = 11 : i64} {
  func.func @kernel(%arg0: i32, %arg1: memref<8x784xf32, #tpu.memory_space<vmem>>, %arg2: memref<784x256xbf16, #tpu.memory_space<vmem>>, %arg3: memref<1x256xf32, #tpu.memory_space<vmem>>, %arg4: memref<256x256xbf16, #tpu.memory_space<vmem>>, %arg5: memref<1x256xf32, #tpu.memory_space<vmem>>, %arg6: memref<256x128xbf16, #tpu.memory_space<vmem>>, %arg7: memref<1x128xf32, #tpu.memory_space<vmem>>, %arg8: memref<8x128xf32, #tpu.memory_space<vmem>>) attributes {dimension_semantics = [#tpu.dimension_semantics<parallel>], iteration_bounds = array<i64: 1>, scalar_prefetch = 0 : i64, scratch_operands = 0 : i64, tpu.core_type = #tpu.core_type<tc>, window_params = [{transform_indices = @transform_0, window_bounds = array<i64: 8, 784>}, {pipeline_mode = #tpu.pipeline_mode<synchronous>, transform_indices = @transform_1, window_bounds = array<i64: 784, 256>}, {pipeline_mode = #tpu.pipeline_mode<synchronous>, transform_indices = @transform_2, window_bounds = array<i64: 1, 256>}, {pipeline_mode = #tpu.pipeline_mode<synchronous>, transform_indices = @transform_3, window_bounds = array<i64: 256, 256>}, {pipeline_mode = #tpu.pipeline_mode<synchronous>, transform_indices = @transform_4, window_bounds = array<i64: 1, 256>}, {pipeline_mode = #tpu.pipeline_mode<synchronous>, transform_indices = @transform_5, window_bounds = array<i64: 256, 128>}, {pipeline_mode = #tpu.pipeline_mode<synchronous>, transform_indices = @transform_6, window_bounds = array<i64: 1, 128>}, {transform_indices = @transform_7, window_bounds = array<i64: 8, 128>}]} {
    %c0 = arith.constant 0 : index
    %c0_0 = arith.constant 0 : index
    %0 = vector.load %arg1[%c0, %c0_0] : memref<8x784xf32, #tpu.memory_space<vmem>>, vector<8x784xf32>
    %1 = arith.truncf %0 : vector<8x784xf32> to vector<8x784xbf16>
    %c0_1 = arith.constant 0 : index
    %c0_2 = arith.constant 0 : index
    %2 = vector.load %arg2[%c0_1, %c0_2] : memref<784x256xbf16, #tpu.memory_space<vmem>>, vector<784x256xbf16>
    %cst = arith.constant dense<0.000000e+00> : vector<8x256xf32>
    %3 = tpu.matmul %1, %2, %cst {dimension_numbers = #tpu.dot_dimension_numbers<[1], [0], [0], [1], [0, 0, 1, 1], [], []>} : vector<8x784xbf16>, vector<784x256xbf16>, vector<8x256xf32> -> vector<8x256xf32>
    %c0_3 = arith.constant 0 : index
    %c0_4 = arith.constant 0 : index
    %4 = vector.load %arg3[%c0_3, %c0_4] : memref<1x256xf32, #tpu.memory_space<vmem>>, vector<1x256xf32>
    %5 = vector.broadcast %4 : vector<1x256xf32> to vector<8x256xf32>
    %6 = arith.addf %3, %5 : vector<8x256xf32>
    %cst_5 = arith.constant 0.000000e+00 : f32
    %7 = vector.broadcast %cst_5 : f32 to vector<8x256xf32>
    %8 = arith.maximumf %6, %7 : vector<8x256xf32>
    %9 = arith.truncf %8 : vector<8x256xf32> to vector<8x256xbf16>
    %c0_6 = arith.constant 0 : index
    %c0_7 = arith.constant 0 : index
    %10 = vector.load %arg4[%c0_6, %c0_7] : memref<256x256xbf16, #tpu.memory_space<vmem>>, vector<256x256xbf16>
    %cst_8 = arith.constant dense<0.000000e+00> : vector<8x256xf32>
    %11 = tpu.matmul %9, %10, %cst_8 {dimension_numbers = #tpu.dot_dimension_numbers<[1], [0], [0], [1], [0, 0, 1, 1], [], []>} : vector<8x256xbf16>, vector<256x256xbf16>, vector<8x256xf32> -> vector<8x256xf32>
    %c0_9 = arith.constant 0 : index
    %c0_10 = arith.constant 0 : index
    %12 = vector.load %arg5[%c0_9, %c0_10] : memref<1x256xf32, #tpu.memory_space<vmem>>, vector<1x256xf32>
    %13 = vector.broadcast %12 : vector<1x256xf32> to vector<8x256xf32>
    %14 = arith.addf %11, %13 : vector<8x256xf32>
    %cst_11 = arith.constant 0.000000e+00 : f32
    %15 = vector.broadcast %cst_11 : f32 to vector<8x256xf32>
    %16 = arith.maximumf %14, %15 : vector<8x256xf32>
    %17 = arith.truncf %16 : vector<8x256xf32> to vector<8x256xbf16>
    %c0_12 = arith.constant 0 : index
    %c0_13 = arith.constant 0 : index
    %18 = vector.load %arg6[%c0_12, %c0_13] : memref<256x128xbf16, #tpu.memory_space<vmem>>, vector<256x128xbf16>
    %cst_14 = arith.constant dense<0.000000e+00> : vector<8x128xf32>
    %19 = tpu.matmul %17, %18, %cst_14 {dimension_numbers = #tpu.dot_dimension_numbers<[1], [0], [0], [1], [0, 0, 1, 1], [], []>} : vector<8x256xbf16>, vector<256x128xbf16>, vector<8x128xf32> -> vector<8x128xf32>
    %c0_15 = arith.constant 0 : index
    %c0_16 = arith.constant 0 : index
    %20 = vector.load %arg7[%c0_15, %c0_16] : memref<1x128xf32, #tpu.memory_space<vmem>>, vector<1x128xf32>
    %21 = vector.broadcast %20 : vector<1x128xf32> to vector<8x128xf32>
    %22 = arith.addf %19, %21 : vector<8x128xf32>
    %c0_17 = arith.constant 0 : index
    %c0_18 = arith.constant 0 : index
    %23 = vector.load %arg8[%c0_17, %c0_18] : memref<8x128xf32, #tpu.memory_space<vmem>>, vector<8x128xf32>
    tpu.vector_store %arg8[%c0_17, %c0_18], %22 {strides = array<i32>} : memref<8x128xf32, #tpu.memory_space<vmem>>, vector<8x128xf32>,
    return
  }
  func.func @transform_0(%arg0: i32) -> (i32, i32) {
    %c0_i32 = arith.constant 0 : i32
    %c0_i32_0 = arith.constant 0 : i32
    return %arg0, %c0_i32 : i32, i32
  }
  func.func @transform_1(%arg0: i32) -> (i32, i32) {
    %c0_i32 = arith.constant 0 : i32
    %c0_i32_0 = arith.constant 0 : i32
    %c0_i32_1 = arith.constant 0 : i32
    return %c0_i32, %c0_i32_0 : i32, i32
  }
  func.func @transform_2(%arg0: i32) -> (i32, i32) {
    %c0_i32 = arith.constant 0 : i32
    %c0_i32_0 = arith.constant 0 : i32
    %c0_i32_1 = arith.constant 0 : i32
    return %c0_i32, %c0_i32_0 : i32, i32
  }
  func.func @transform_3(%arg0: i32) -> (i32, i32) {
    %c0_i32 = arith.constant 0 : i32
    %c0_i32_0 = arith.constant 0 : i32
    %c0_i32_1 = arith.constant 0 : i32
    return %c0_i32, %c0_i32_0 : i32, i32
  }
  func.func @transform_4(%arg0: i32) -> (i32, i32) {
    %c0_i32 = arith.constant 0 : i32
    %c0_i32_0 = arith.constant 0 : i32
    %c0_i32_1 = arith.constant 0 : i32
    return %c0_i32, %c0_i32_0 : i32, i32
  }
  func.func @transform_5(%arg0: i32) -> (i32, i32) {
    %c0_i32 = arith.constant 0 : i32
    %c0_i32_0 = arith.constant 0 : i32
    %c0_i32_1 = arith.constant 0 : i32
    return %c0_i32, %c0_i32_0 : i32, i32
  }
  func.func @transform_6(%arg0: i32) -> (i32, i32) {
    %c0_i32 = arith.constant 0 : i32
    %c0_i32_0 = arith.constant 0 : i32
    %c0_i32_1 = arith.constant 0 : i32
    return %c0_i32, %c0_i32_0 : i32, i32
  }
  func.func @transform_7(%arg0: i32) -> (i32, i32) {
    %c0_i32 = arith.constant 0 : i32
    %c0_i32_0 = arith.constant 0 : i32
    return %arg0, %c0_i32 : i32, i32
  }
}

</mosaic_0001>

<llo_original>
// kernel: net_forward.1
$region0: #{net_forward.1}
  #allocation0 [shape = 'u32[]', space=smem, size = 0x4, offset = 0x4, fixed_abs, tag = 'smem constant byte address 0x4 - core index']
  #allocation1 [shape = 'u32[72,128]{1,0:T(1,128)}', space=vmem, size = 0x9000, scoped, tag = 'internal scratch']
  %s0 = inlined_call_operand.vmem [shape: f32[8,784], index: 0, kind: input, shape index: {}]
  %s1 = inlined_call_operand.vmem [shape: bf16[784,256], index: 1, kind: input, shape index: {}]
  %s2 = inlined_call_operand.vmem [shape: f32[1,256], index: 2, kind: input, shape index: {}]
  %s3 = inlined_call_operand.vmem [shape: bf16[256,256], index: 3, kind: input, shape index: {}]
  %s4 = inlined_call_operand.vmem [shape: f32[1,256], index: 4, kind: input, shape index: {}]
  %s5 = inlined_call_operand.vmem [shape: bf16[256,128], index: 5, kind: input, shape index: {}]
  %s6 = inlined_call_operand.vmem [shape: f32[1,128], index: 6, kind: input, shape index: {}]
  %s7 = inlined_call_operand.hbm [shape: f32[8,128], index: 7, kind: output, shape index: {}]
  %s8 = sld [smem:[#allocation0]]
  $region38: #{net_forward.1} parent=0
    _
  %s10 = ssub.s32 1, %s8
  %s11 = scalar_select 0, %s10, %s8
  $region1: #{net_forward.1} parent=0
    #allocation2 [shape = 'u8[4096]{0}', space=vmem, size = 0x1000, scoped, tag = 'output window, operand 0, single buffered']
    #allocation3 [shape = 's32[1]{0}', space=sflag, size = 0x4, scoped, tag = 'scoped memory for net_forward.1']
    %12 = vsyncpa [#allocation3], 0
    // Predicated region
    $region2: #{net_forward.1} parent=1 // pred_check
      _
    $region3: #{net_forward.1} parent=1 // pred_check_branch
      %14 = sbr.rel (0) target = $region5
    $region4: #{net_forward.1} parent=1 // pred_region
      _
    $region5: #{net_forward.1} parent=1 // pred_fallthru
      _
    // Predicated region
    $region6: #{net_forward.1} parent=1 // pred_check
      _
    $region7: #{net_forward.1} parent=1 // pred_check_branch
      %16 = sbr.rel (0) target = $region9
    $region8: #{net_forward.1} parent=1 // pred_region
      _
    $region9: #{net_forward.1} parent=1 // pred_fallthru
      _
    // Predicated region
    $region10: #{net_forward.1} parent=1 // pred_check
      _
    $region11: #{net_forward.1} parent=1 // pred_check_branch
      %18 = sbr.rel (0) target = $region13
    $region12: #{net_forward.1} parent=1 // pred_region
      _
    $region13: #{net_forward.1} parent=1 // pred_fallthru
      _
    // Predicated region
    $region14: #{net_forward.1} parent=1 // pred_check
      _
    $region15: #{net_forward.1} parent=1 // pred_check_branch
      %20 = sbr.rel (0) target = $region17
    $region16: #{net_forward.1} parent=1 // pred_region
      _
    $region17: #{net_forward.1} parent=1 // pred_fallthru
      _
    // Predicated region
    $region18: #{net_forward.1} parent=1 // pred_check
      _
    $region19: #{net_forward.1} parent=1 // pred_check_branch
      %22 = sbr.rel (0) target = $region21
    $region20: #{net_forward.1} parent=1 // pred_region
      _
    $region21: #{net_forward.1} parent=1 // pred_fallthru
      _
    // Predicated region
    $region22: #{net_forward.1} parent=1 // pred_check
      _
    $region23: #{net_forward.1} parent=1 // pred_check_branch
      %24 = sbr.rel (0) target = $region25
    $region24: #{net_forward.1} parent=1 // pred_region
      _
    $region25: #{net_forward.1} parent=1 // pred_fallthru
      _
    // Predicated region
    $region26: #{net_forward.1} parent=1 // pred_check
      _
    $region27: #{net_forward.1} parent=1 // pred_check_branch
      %26 = sbr.rel (0) target = $region29
    $region28: #{net_forward.1} parent=1 // pred_region
      _
    $region29: #{net_forward.1} parent=1 // pred_fallthru
      _
    %v28 = vld [vmem:[%s0] sm:$0xff]
    %v29 = vld [vmem:[%s0 + $0x8] sm:$0xff]
    %v30 = vld [vmem:[%s0 + $0x10] sm:$0xff]
    %v31 = vld [vmem:[%s0 + $0x18] sm:$0xff]
    %v32 = vld [vmem:[%s0 + $0x20] sm:$0xff]
    %v33 = vld [vmem:[%s0 + $0x28] sm:$0xff]
    %v34 = vld [vmem:[%s0 + $0x30] sm:$0xff]
    %v35 = vpack.c.bf16 %v28, %v28
    %v36 = vpack.c.bf16 %v29, %v29
    %v37 = vpack.c.bf16 %v30, %v30
    %v38 = vpack.c.bf16 %v31, %v31
    %v39 = vpack.c.bf16 %v32, %v32
    %v40 = vpack.c.bf16 %v33, %v33
    %v41 = vpack.c.bf16 %v34, %v34
    %v42 = vld [vmem:[%s1] sm:$0xff]
    %v43 = vld [vmem:[%s1 + $0x8] sm:$0xff]
    %v44 = vld [vmem:[%s1 + $0x10] sm:$0xff]
    %v45 = vld [vmem:[%s1 + $0x18] sm:$0xff]
    %v46 = vld [vmem:[%s1 + $0x20] sm:$0xff]
    %v47 = vld [vmem:[%s1 + $0x28] sm:$0xff]
    %v48 = vld [vmem:[%s1 + $0x30] sm:$0xff]
    %v49 = vld [vmem:[%s1 + $0x38] sm:$0xff]
    %v50 = vld [vmem:[%s1 + $0x40] sm:$0xff]
    %v51 = vld [vmem:[%s1 + $0x48] sm:$0xff]
    %v52 = vld [vmem:[%s1 + $0x50] sm:$0xff]
    %v53 = vld [vmem:[%s1 + $0x58] sm:$0xff]
    %v54 = vld [vmem:[%s1 + $0x60] sm:$0xff]
    %v55 = vld [vmem:[%s1 + $0x68] sm:$0xff]
    %v56 = vld [vmem:[%s1 + $0x70] sm:$0xff]
    %v57 = vld [vmem:[%s1 + $0x78] sm:$0xff]
    %v58 = vld [vmem:[%s1 + $0x80] sm:$0xff]
    %v59 = vld [vmem:[%s1 + $0x88] sm:$0xff]
    %v60 = vld [vmem:[%s1 + $0x90] sm:$0xff]
    %v61 = vld [vmem:[%s1 + $0x98] sm:$0xff]
    %v62 = vld [vmem:[%s1 + $0xa0] sm:$0xff]
    %v63 = vld [vmem:[%s1 + $0xa8] sm:$0xff]
    %v64 = vld [vmem:[%s1 + $0xb0] sm:$0xff]
    %v65 = vld [vmem:[%s1 + $0xb8] sm:$0xff]
    %v66 = vld [vmem:[%s1 + $0xc0] sm:$0xff]
    %v67 = vld [vmem:[%s1 + $0xc8] sm:$0xff]
    %v68 = vld [vmem:[%s1 + $0xd0] sm:$0xff]
    %v69 = vld [vmem:[%s1 + $0xd8] sm:$0xff]
    %v70 = vld [vmem:[%s1 + $0xe0] sm:$0xff]
    %v71 = vld [vmem:[%s1 + $0xe8] sm:$0xff]
    %v72 = vld [vmem:[%s1 + $0xf0] sm:$0xff]
    %v73 = vld [vmem:[%s1 + $0xf8] sm:$0xff]
    %v74 = vld [vmem:[%s1 + $0x100] sm:$0xff]
    %v75 = vld [vmem:[%s1 + $0x108] sm:$0xff]
    %v76 = vld [vmem:[%s1 + $0x110] sm:$0xff]
    %v77 = vld [vmem:[%s1 + $0x118] sm:$0xff]
    %v78 = vld [vmem:[%s1 + $0x120] sm:$0xff]
    %v79 = vld [vmem:[%s1 + $0x128] sm:$0xff]
    %v80 = vld [vmem:[%s1 + $0x130] sm:$0xff]
    %v81 = vld [vmem:[%s1 + $0x138] sm:$0xff]
    %v82 = vld [vmem:[%s1 + $0x140] sm:$0xff]
    %v83 = vld [vmem:[%s1 + $0x148] sm:$0xff]
    %v84 = vld [vmem:[%s1 + $0x150] sm:$0xff]
    %v85 = vld [vmem:[%s1 + $0x158] sm:$0xff]
    %v86 = vld [vmem:[%s1 + $0x160] sm:$0xff]
    %v87 = vld [vmem:[%s1 + $0x168] sm:$0xff]
    %v88 = vld [vmem:[%s1 + $0x170] sm:$0xff]
    %v89 = vld [vmem:[%s1 + $0x178] sm:$0xff]
    %v90 = vld [vmem:[%s1 + $0x180] sm:$0xff]
    %v91 = vld [vmem:[%s1 + $0x188] sm:$0xff]
    %v92 = vld [vmem:[%s1 + $0x190] sm:$0xff]
    %v93 = vld [vmem:[%s1 + $0x198] sm:$0xff]
    %v94 = vld [vmem:[%s1 + $0x1a0] sm:$0xff]
    %v95 = vld [vmem:[%s1 + $0x1a8] sm:$0xff]
    %v96 = vld [vmem:[%s1 + $0x1b0] sm:$0xff]
    %v97 = vld [vmem:[%s1 + $0x1b8] sm:$0xff]
    %v98 = vld [vmem:[%s1 + $0x1c0] sm:$0xff]
    %v99 = vld [vmem:[%s1 + $0x1c8] sm:$0xff]
    %v100 = vld [vmem:[%s1 + $0x1d0] sm:$0xff]
    %v101 = vld [vmem:[%s1 + $0x1d8] sm:$0xff]
    %v102 = vld [vmem:[%s1 + $0x1e0] sm:$0xff]
    %v103 = vld [vmem:[%s1 + $0x1e8] sm:$0xff]
    %v104 = vld [vmem:[%s1 + $0x1f0] sm:$0xff]
    %v105 = vld [vmem:[%s1 + $0x1f8] sm:$0xff]
    %v106 = vld [vmem:[%s1 + $0x200] sm:$0xff]
    %v107 = vld [vmem:[%s1 + $0x208] sm:$0xff]
    %v108 = vld [vmem:[%s1 + $0x210] sm:$0xff]
    %v109 = vld [vmem:[%s1 + $0x218] sm:$0xff]
    %v110 = vld [vmem:[%s1 + $0x220] sm:$0xff]
    %v111 = vld [vmem:[%s1 + $0x228] sm:$0xff]
    %v112 = vld [vmem:[%s1 + $0x230] sm:$0xff]
    %v113 = vld [vmem:[%s1 + $0x238] sm:$0xff]
    %v114 = vld [vmem:[%s1 + $0x240] sm:$0xff]
    %v115 = vld [vmem:[%s1 + $0x248] sm:$0xff]
    %v116 = vld [vmem:[%s1 + $0x250] sm:$0xff]
    %v117 = vld [vmem:[%s1 + $0x258] sm:$0xff]
    %v118 = vld [vmem:[%s1 + $0x260] sm:$0xff]
    %v119 = vld [vmem:[%s1 + $0x268] sm:$0xff]
    %v120 = vld [vmem:[%s1 + $0x270] sm:$0xff]
    %v121 = vld [vmem:[%s1 + $0x278] sm:$0xff]
    %v122 = vld [vmem:[%s1 + $0x280] sm:$0xff]
    %v123 = vld [vmem:[%s1 + $0x288] sm:$0xff]
    %v124 = vld [vmem:[%s1 + $0x290] sm:$0xff]
    %v125 = vld [vmem:[%s1 + $0x298] sm:$0xff]
    %v126 = vld [vmem:[%s1 + $0x2a0] sm:$0xff]
    %v127 = vld [vmem:[%s1 + $0x2a8] sm:$0xff]
    %v128 = vld [vmem:[%s1 + $0x2b0] sm:$0xff]
    %v129 = vld [vmem:[%s1 + $0x2b8] sm:$0xff]
    %v130 = vld [vmem:[%s1 + $0x2c0] sm:$0xff]
    %v131 = vld [vmem:[%s1 + $0x2c8] sm:$0xff]
    %v132 = vld [vmem:[%s1 + $0x2d0] sm:$0xff]
    %v133 = vld [vmem:[%s1 + $0x2d8] sm:$0xff]
    %v134 = vld [vmem:[%s1 + $0x2e0] sm:$0xff]
    %v135 = vld [vmem:[%s1 + $0x2e8] sm:$0xff]
    %v136 = vld [vmem:[%s1 + $0x2f0] sm:$0xff]
    %v137 = vld [vmem:[%s1 + $0x2f8] sm:$0xff]
    %v138 = vld [vmem:[%s1 + $0x300] sm:$0xff]
    %v139 = vld [vmem:[%s1 + $0x308] sm:$0xff]
    %v140 = vld [vmem:[%s2] sm:$0x3]
    %v142 = vperm.slane %v140, 0
    %v143 = vperm.slane %v140, 1
    %v244 = vunpack.c.l.b16 %v42
    %v245 = vunpack.c.h.b16 %v42
    %v246 = vunpack.c.l.b16 %v43
    %v247 = vunpack.c.h.b16 %v43
    %v248 = vunpack.c.l.b16 %v44
    %v249 = vunpack.c.h.b16 %v44
    %v250 = vunpack.c.l.b16 %v45
    %v251 = vunpack.c.h.b16 %v45
    %v252 = vunpack.c.l.b16 %v46
    %v253 = vunpack.c.h.b16 %v46
    %v254 = vunpack.c.l.b16 %v47
    %v255 = vunpack.c.h.b16 %v47
    %v256 = vunpack.c.l.b16 %v48
    %v257 = vunpack.c.h.b16 %v48
    %v258 = vunpack.c.l.b16 %v49
    %v259 = vunpack.c.h.b16 %v49
    %v260 = vunpack.c.l.b16 %v50
    %v261 = vunpack.c.h.b16 %v50
    %v262 = vunpack.c.l.b16 %v51
    %v263 = vunpack.c.h.b16 %v51
    %v264 = vunpack.c.l.b16 %v52
    %v265 = vunpack.c.h.b16 %v52
    %v266 = vunpack.c.l.b16 %v53
    %v267 = vunpack.c.h.b16 %v53
    %v268 = vunpack.c.l.b16 %v54
    %v269 = vunpack.c.h.b16 %v54
    %v270 = vunpack.c.l.b16 %v55
    %v271 = vunpack.c.h.b16 %v55
    %v272 = vunpack.c.l.b16 %v56
    %v273 = vunpack.c.h.b16 %v56
    %v274 = vunpack.c.l.b16 %v57
    %v275 = vunpack.c.h.b16 %v57
    %v276 = vunpack.c.l.b16 %v58
    %v277 = vunpack.c.h.b16 %v58
    %v278 = vunpack.c.l.b16 %v59
    %v279 = vunpack.c.h.b16 %v59
    %v280 = vunpack.c.l.b16 %v60
    %v281 = vunpack.c.h.b16 %v60
    %v282 = vunpack.c.l.b16 %v61
    %v283 = vunpack.c.h.b16 %v61
    %v284 = vunpack.c.l.b16 %v62
    %v285 = vunpack.c.h.b16 %v62
    %v286 = vunpack.c.l.b16 %v63
    %v287 = vunpack.c.h.b16 %v63
    %v288 = vunpack.c.l.b16 %v64
    %v289 = vunpack.c.h.b16 %v64
    %v290 = vunpack.c.l.b16 %v65
    %v291 = vunpack.c.h.b16 %v65
    %v292 = vunpack.c.l.b16 %v66
    %v293 = vunpack.c.h.b16 %v66
    %v294 = vunpack.c.l.b16 %v67
    %v295 = vunpack.c.h.b16 %v67
    %v296 = vunpack.c.l.b16 %v68
    %v297 = vunpack.c.h.b16 %v68
    %v298 = vunpack.c.l.b16 %v69
    %v299 = vunpack.c.h.b16 %v69
    %v300 = vunpack.c.l.b16 %v70
    %v301 = vunpack.c.h.b16 %v70
    %v302 = vunpack.c.l.b16 %v71
    %v303 = vunpack.c.h.b16 %v71
    %v304 = vunpack.c.l.b16 %v72
    %v305 = vunpack.c.h.b16 %v72
    %v306 = vunpack.c.l.b16 %v73
    %v307 = vunpack.c.h.b16 %v73
    %v308 = vunpack.c.l.b16 %v74
    %v309 = vunpack.c.h.b16 %v74
    %v310 = vunpack.c.l.b16 %v75
    %v311 = vunpack.c.h.b16 %v75
    %v312 = vunpack.c.l.b16 %v76
    %v313 = vunpack.c.h.b16 %v76
    %v314 = vunpack.c.l.b16 %v77
    %v315 = vunpack.c.h.b16 %v77
    %v316 = vunpack.c.l.b16 %v78
    %v317 = vunpack.c.h.b16 %v78
    %v318 = vunpack.c.l.b16 %v79
    %v319 = vunpack.c.h.b16 %v79
    %v320 = vunpack.c.l.b16 %v80
    %v321 = vunpack.c.h.b16 %v80
    %v322 = vunpack.c.l.b16 %v81
    %v323 = vunpack.c.h.b16 %v81
    %v324 = vunpack.c.l.b16 %v82
    %v325 = vunpack.c.h.b16 %v82
    %v326 = vunpack.c.l.b16 %v83
    %v327 = vunpack.c.h.b16 %v83
    %v328 = vunpack.c.l.b16 %v84
    %v329 = vunpack.c.h.b16 %v84
    %v330 = vunpack.c.l.b16 %v85
    %v331 = vunpack.c.h.b16 %v85
    %v332 = vunpack.c.l.b16 %v86
    %v333 = vunpack.c.h.b16 %v86
    %v334 = vunpack.c.l.b16 %v87
    %v335 = vunpack.c.h.b16 %v87
    %v336 = vunpack.c.l.b16 %v88
    %v337 = vunpack.c.h.b16 %v88
    %v338 = vunpack.c.l.b16 %v89
    %v339 = vunpack.c.h.b16 %v89
    %v340 = vunpack.c.l.b16 %v90
    %v341 = vunpack.c.h.b16 %v90
    %v342 = vunpack.c.l.b16 %v91
    %v343 = vunpack.c.h.b16 %v91
    %v344 = vunpack.c.l.b16 %v92
    %v345 = vunpack.c.h.b16 %v92
    %v346 = vunpack.c.l.b16 %v93
    %v347 = vunpack.c.h.b16 %v93
    %v348 = vunpack.c.l.b16 %v94
    %v349 = vunpack.c.h.b16 %v94
    %v350 = vunpack.c.l.b16 %v95
    %v351 = vunpack.c.h.b16 %v95
    %v352 = vunpack.c.l.b16 %v96
    %v353 = vunpack.c.h.b16 %v96
    %v354 = vunpack.c.l.b16 %v97
    %v355 = vunpack.c.h.b16 %v97
    %v356 = vunpack.c.l.b16 %v98
    %v357 = vunpack.c.h.b16 %v98
    %v358 = vunpack.c.l.b16 %v99
    %v359 = vunpack.c.h.b16 %v99
    %v360 = vunpack.c.l.b16 %v100
    %v361 = vunpack.c.h.b16 %v100
    %v362 = vunpack.c.l.b16 %v101
    %v363 = vunpack.c.h.b16 %v101
    %v364 = vunpack.c.l.b16 %v102
    %v365 = vunpack.c.h.b16 %v102
    %v366 = vunpack.c.l.b16 %v103
    %v367 = vunpack.c.h.b16 %v103
    %v368 = vunpack.c.l.b16 %v104
    %v369 = vunpack.c.h.b16 %v104
    %v370 = vunpack.c.l.b16 %v105
    %v371 = vunpack.c.h.b16 %v105
    %v372 = vunpack.c.l.b16 %v106
    %v373 = vunpack.c.h.b16 %v106
    %v374 = vunpack.c.l.b16 %v107
    %v375 = vunpack.c.h.b16 %v107
    %v376 = vunpack.c.l.b16 %v108
    %v377 = vunpack.c.h.b16 %v108
    %v378 = vunpack.c.l.b16 %v109
    %v379 = vunpack.c.h.b16 %v109
    %v380 = vunpack.c.l.b16 %v110
    %v381 = vunpack.c.h.b16 %v110
    %v382 = vunpack.c.l.b16 %v111
    %v383 = vunpack.c.h.b16 %v111
    %v384 = vunpack.c.l.b16 %v112
    %v385 = vunpack.c.h.b16 %v112
    %v386 = vunpack.c.l.b16 %v113
    %v387 = vunpack.c.h.b16 %v113
    %v388 = vunpack.c.l.b16 %v114
    %v389 = vunpack.c.h.b16 %v114
    %v390 = vunpack.c.l.b16 %v115
    %v391 = vunpack.c.h.b16 %v115
    %v392 = vunpack.c.l.b16 %v116
    %v393 = vunpack.c.h.b16 %v116
    %v394 = vunpack.c.l.b16 %v117
    %v395 = vunpack.c.h.b16 %v117
    %v396 = vunpack.c.l.b16 %v118
    %v397 = vunpack.c.h.b16 %v118
    %v398 = vunpack.c.l.b16 %v119
    %v399 = vunpack.c.h.b16 %v119
    %v400 = vunpack.c.l.b16 %v120
    %v401 = vunpack.c.h.b16 %v120
    %v402 = vunpack.c.l.b16 %v121
    %v403 = vunpack.c.h.b16 %v121
    %v404 = vunpack.c.l.b16 %v122
    %v405 = vunpack.c.h.b16 %v122
    %v406 = vunpack.c.l.b16 %v123
    %v407 = vunpack.c.h.b16 %v123
    %v408 = vunpack.c.l.b16 %v124
    %v409 = vunpack.c.h.b16 %v124
    %v410 = vunpack.c.l.b16 %v125
    %v411 = vunpack.c.h.b16 %v125
    %v412 = vunpack.c.l.b16 %v126
    %v413 = vunpack.c.h.b16 %v126
    %v414 = vunpack.c.l.b16 %v127
    %v415 = vunpack.c.h.b16 %v127
    %v416 = vunpack.c.l.b16 %v128
    %v417 = vunpack.c.h.b16 %v128
    %v418 = vunpack.c.l.b16 %v129
    %v419 = vunpack.c.h.b16 %v129
    %v420 = vunpack.c.l.b16 %v130
    %v421 = vunpack.c.h.b16 %v130
    %v422 = vunpack.c.l.b16 %v131
    %v423 = vunpack.c.h.b16 %v131
    %v424 = vunpack.c.l.b16 %v132
    %v425 = vunpack.c.h.b16 %v132
    %v426 = vunpack.c.l.b16 %v133
    %v427 = vunpack.c.h.b16 %v133
    %v428 = vunpack.c.l.b16 %v134
    %v429 = vunpack.c.h.b16 %v134
    %v430 = vunpack.c.l.b16 %v135
    %v431 = vunpack.c.h.b16 %v135
    %v432 = vunpack.c.l.b16 %v136
    %v433 = vunpack.c.h.b16 %v136
    %v434 = vunpack.c.l.b16 %v137
    %v435 = vunpack.c.h.b16 %v137
    %v436 = vunpack.c.l.b16 %v138
    %v437 = vunpack.c.h.b16 %v138
    %v438 = vunpack.c.l.b16 %v139
    %v439 = vunpack.c.h.b16 %v139
    %v440 = vpack.c.b16 %v246, %v244
    %v441 = vpack.c.b16 %v247, %v245
    %v442 = vpack.c.b16 %v250, %v248
    %v443 = vpack.c.b16 %v251, %v249
    %v444 = vpack.c.b16 %v254, %v252
    %v445 = vpack.c.b16 %v255, %v253
    %v446 = vpack.c.b16 %v258, %v256
    %v447 = vpack.c.b16 %v259, %v257
    %v448 = vpack.c.b16 %v262, %v260
    %v449 = vpack.c.b16 %v263, %v261
    %v450 = vpack.c.b16 %v266, %v264
    %v451 = vpack.c.b16 %v267, %v265
    %v452 = vpack.c.b16 %v270, %v268
    %v453 = vpack.c.b16 %v271, %v269
    %v454 = vpack.c.b16 %v274, %v272
    %v455 = vpack.c.b16 %v275, %v273
    %v456 = vpack.c.b16 %v278, %v276
    %v457 = vpack.c.b16 %v279, %v277
    %v458 = vpack.c.b16 %v282, %v280
    %v459 = vpack.c.b16 %v283, %v281
    %v460 = vpack.c.b16 %v286, %v284
    %v461 = vpack.c.b16 %v287, %v285
    %v462 = vpack.c.b16 %v290, %v288
    %v463 = vpack.c.b16 %v291, %v289
    %v464 = vpack.c.b16 %v294, %v292
    %v465 = vpack.c.b16 %v295, %v293
    %v466 = vpack.c.b16 %v298, %v296
    %v467 = vpack.c.b16 %v299, %v297
    %v468 = vpack.c.b16 %v302, %v300
    %v469 = vpack.c.b16 %v303, %v301
    %v470 = vpack.c.b16 %v306, %v304
    %v471 = vpack.c.b16 %v307, %v305
    %v472 = vpack.c.b16 %v310, %v308
    %v473 = vpack.c.b16 %v311, %v309
    %v474 = vpack.c.b16 %v314, %v312
    %v475 = vpack.c.b16 %v315, %v313
    %v476 = vpack.c.b16 %v318, %v316
    %v477 = vpack.c.b16 %v319, %v317
    %v478 = vpack.c.b16 %v322, %v320
    %v479 = vpack.c.b16 %v323, %v321
    %v480 = vpack.c.b16 %v326, %v324
    %v481 = vpack.c.b16 %v327, %v325
    %v482 = vpack.c.b16 %v330, %v328
    %v483 = vpack.c.b16 %v331, %v329
    %v484 = vpack.c.b16 %v334, %v332
    %v485 = vpack.c.b16 %v335, %v333
    %v486 = vpack.c.b16 %v338, %v336
    %v487 = vpack.c.b16 %v339, %v337
    %v488 = vpack.c.b16 %v342, %v340
    %v489 = vpack.c.b16 %v343, %v341
    %v490 = vpack.c.b16 %v346, %v344
    %v491 = vpack.c.b16 %v347, %v345
    %v492 = vpack.c.b16 %v350, %v348
    %v493 = vpack.c.b16 %v351, %v349
    %v494 = vpack.c.b16 %v354, %v352
    %v495 = vpack.c.b16 %v355, %v353
    %v496 = vpack.c.b16 %v358, %v356
    %v497 = vpack.c.b16 %v359, %v357
    %v498 = vpack.c.b16 %v362, %v360
    %v499 = vpack.c.b16 %v363, %v361
    %v500 = vpack.c.b16 %v366, %v364
    %v501 = vpack.c.b16 %v367, %v365
    %v502 = vpack.c.b16 %v370, %v368
    %v503 = vpack.c.b16 %v371, %v369
    %v504 = vpack.c.b16 %v374, %v372
    %v505 = vpack.c.b16 %v375, %v373
    %v506 = vpack.c.b16 %v378, %v376
    %v507 = vpack.c.b16 %v379, %v377
    %v508 = vpack.c.b16 %v382, %v380
    %v509 = vpack.c.b16 %v383, %v381
    %v510 = vpack.c.b16 %v386, %v384
    %v511 = vpack.c.b16 %v387, %v385
    %v512 = vpack.c.b16 %v390, %v388
    %v513 = vpack.c.b16 %v391, %v389
    %v514 = vpack.c.b16 %v394, %v392
    %v515 = vpack.c.b16 %v395, %v393
    %v516 = vpack.c.b16 %v398, %v396
    %v517 = vpack.c.b16 %v399, %v397
    %v518 = vpack.c.b16 %v402, %v400
    %v519 = vpack.c.b16 %v403, %v401
    %v520 = vpack.c.b16 %v406, %v404
    %v521 = vpack.c.b16 %v407, %v405
    %v522 = vpack.c.b16 %v410, %v408
    %v523 = vpack.c.b16 %v411, %v409
    %v524 = vpack.c.b16 %v414, %v412
    %v525 = vpack.c.b16 %v415, %v413
    %v526 = vpack.c.b16 %v418, %v416
    %v527 = vpack.c.b16 %v419, %v417
    %v528 = vpack.c.b16 %v422, %v420
    %v529 = vpack.c.b16 %v423, %v421
    %v530 = vpack.c.b16 %v426, %v424
    %v531 = vpack.c.b16 %v427, %v425
    %v532 = vpack.c.b16 %v430, %v428
    %v533 = vpack.c.b16 %v431, %v429
    %v534 = vpack.c.b16 %v434, %v432
    %v535 = vpack.c.b16 %v435, %v433
    %v536 = vpack.c.b16 %v438, %v436
    %v537 = vpack.c.b16 %v439, %v437
    %vm636 = vcmask 130048
    %v638 = vsel %vm636, %v41, 0
    %640 = vmatpush.bf16.msra.mxu0 %v454
    %641 = vmatpush.bf16.msra.mxu0 %v452
    %642 = vmatpush.bf16.msra.mxu0 %v450
    %643 = vmatpush.bf16.msra.mxu0 %v448
    %644 = vmatpush.bf16.msra.mxu0 %v446
    %645 = vmatpush.bf16.msra.mxu0 %v444
    %646 = vmatpush.bf16.msra.mxu0 %v442
    %647 = vmatpush.bf16.msra.mxu0 %v440
    %648 = vmatmul.bf16.gmra.mxu0 %v35
    %v649 = vpop.f32.mrf.mxu0
    %v650 = vadd.f32 %v142, %v649
    %v651 = vpop.f32.mrf.mxu0
    %652 = vdwg.mxu0
    %653 = vmatpush.bf16.msra.mxu0 %v470
    %654 = vmatpush.bf16.msra.mxu0 %v468
    %655 = vmatpush.bf16.msra.mxu0 %v466
    %656 = vmatpush.bf16.msra.mxu0 %v464
    %657 = vmatpush.bf16.msra.mxu0 %v462
    %658 = vmatpush.bf16.msra.mxu0 %v460
    %659 = vmatpush.bf16.msra.mxu0 %v458
    %660 = vmatpush.bf16.msra.mxu0 %v456
    %661 = vmatmul.bf16.gmra.mxu0 %v36
    %v662 = vpop.f32.mrf.mxu0
    %v663 = vadd.f32 %v650, %v662
    %v664 = vpop.f32.mrf.mxu0
    %665 = vdwg.mxu0
    %666 = vmatpush.bf16.msra.mxu0 %v486
    %667 = vmatpush.bf16.msra.mxu0 %v484
    %668 = vmatpush.bf16.msra.mxu0 %v482
    %669 = vmatpush.bf16.msra.mxu0 %v480
    %670 = vmatpush.bf16.msra.mxu0 %v478
    %671 = vmatpush.bf16.msra.mxu0 %v476
    %672 = vmatpush.bf16.msra.mxu0 %v474
    %673 = vmatpush.bf16.msra.mxu0 %v472
    %674 = vmatmul.bf16.gmra.mxu0 %v37
    %v675 = vpop.f32.mrf.mxu0
    %v676 = vadd.f32 %v663, %v675
    %v677 = vpop.f32.mrf.mxu0
    %678 = vdwg.mxu0
    %679 = vmatpush.bf16.msra.mxu0 %v502
    %680 = vmatpush.bf16.msra.mxu0 %v500
    %681 = vmatpush.bf16.msra.mxu0 %v498
    %682 = vmatpush.bf16.msra.mxu0 %v496
    %683 = vmatpush.bf16.msra.mxu0 %v494
    %684 = vmatpush.bf16.msra.mxu0 %v492
    %685 = vmatpush.bf16.msra.mxu0 %v490
    %686 = vmatpush.bf16.msra.mxu0 %v488
    %687 = vmatmul.bf16.gmra.mxu0 %v38
    %v688 = vpop.f32.mrf.mxu0
    %v689 = vadd.f32 %v676, %v688
    %v690 = vpop.f32.mrf.mxu0
    %691 = vdwg.mxu0
    %692 = vmatpush.bf16.msra.mxu0 %v518
    %693 = vmatpush.bf16.msra.mxu0 %v516
    %694 = vmatpush.bf16.msra.mxu0 %v514
    %695 = vmatpush.bf16.msra.mxu0 %v512
    %696 = vmatpush.bf16.msra.mxu0 %v510
    %697 = vmatpush.bf16.msra.mxu0 %v508
    %698 = vmatpush.bf16.msra.mxu0 %v506
    %699 = vmatpush.bf16.msra.mxu0 %v504
    %700 = vmatmul.bf16.gmra.mxu0 %v39
    %v701 = vpop.f32.mrf.mxu0
    %v702 = vadd.f32 %v689, %v701
    %v703 = vpop.f32.mrf.mxu0
    %704 = vdwg.mxu0
    %705 = vmatpush.bf16.msra.mxu0 %v534
    %706 = vmatpush.bf16.msra.mxu0 %v532
    %707 = vmatpush.bf16.msra.mxu0 %v530
    %708 = vmatpush.bf16.msra.mxu0 %v528
    %709 = vmatpush.bf16.msra.mxu0 %v526
    %710 = vmatpush.bf16.msra.mxu0 %v524
    %711 = vmatpush.bf16.msra.mxu0 %v522
    %712 = vmatpush.bf16.msra.mxu0 %v520
    %713 = vmatmul.bf16.gmra.mxu0 %v40
    %v714 = vpop.f32.mrf.mxu0
    %v715 = vadd.f32 %v702, %v714
    %v716 = vpop.f32.mrf.mxu0
    %717 = vdwg.mxu0
    %718 = vmatpush.bf16.msra.mxu0 0
    %719 = vmatpush.bf16.msra.mxu0 0
    %720 = vmatpush.bf16.msra.mxu0 0
    %721 = vmatpush.bf16.msra.mxu0 0
    %722 = vmatpush.bf16.msra.mxu0 0
    %723 = vmatpush.bf16.msra.mxu0 0
    %724 = vmatpush.bf16.msra.mxu0 0
    %725 = vmatpush.bf16.msra.mxu0 %v536
    %726 = vmatmul.bf16.gmra.mxu0 %v638
    %v727 = vpop.f32.mrf.mxu0
    %v728 = vadd.f32 %v715, %v727
    %v729 = vpop.f32.mrf.mxu0
    %730 = vdwg.mxu0
    %731 = vmatpush.bf16.msra.mxu0 %v455
    %732 = vmatpush.bf16.msra.mxu0 %v453
    %733 = vmatpush.bf16.msra.mxu0 %v451
    %734 = vmatpush.bf16.msra.mxu0 %v449
    %735 = vmatpush.bf16.msra.mxu0 %v447
    %736 = vmatpush.bf16.msra.mxu0 %v445
    %737 = vmatpush.bf16.msra.mxu0 %v443
    %738 = vmatpush.bf16.msra.mxu0 %v441
    %739 = vmatmul.bf16.gmra.mxu0 %v35
    %v740 = vpop.f32.mrf.mxu0
    %v741 = vadd.f32 %v143, %v740
    %v742 = vpop.f32.mrf.mxu0
    %743 = vdwg.mxu0
    %744 = vmatpush.bf16.msra.mxu0 %v471
    %745 = vmatpush.bf16.msra.mxu0 %v469
    %746 = vmatpush.bf16.msra.mxu0 %v467
    %747 = vmatpush.bf16.msra.mxu0 %v465
    %748 = vmatpush.bf16.msra.mxu0 %v463
    %749 = vmatpush.bf16.msra.mxu0 %v461
    %750 = vmatpush.bf16.msra.mxu0 %v459
    %751 = vmatpush.bf16.msra.mxu0 %v457
    %752 = vmatmul.bf16.gmra.mxu0 %v36
    %v753 = vpop.f32.mrf.mxu0
    %v754 = vadd.f32 %v741, %v753
    %v755 = vpop.f32.mrf.mxu0
    %756 = vdwg.mxu0
    %757 = vmatpush.bf16.msra.mxu0 %v487
    %758 = vmatpush.bf16.msra.mxu0 %v485
    %759 = vmatpush.bf16.msra.mxu0 %v483
    %760 = vmatpush.bf16.msra.mxu0 %v481
    %761 = vmatpush.bf16.msra.mxu0 %v479
    %762 = vmatpush.bf16.msra.mxu0 %v477
    %763 = vmatpush.bf16.msra.mxu0 %v475
    %764 = vmatpush.bf16.msra.mxu0 %v473
    %765 = vmatmul.bf16.gmra.mxu0 %v37
    %v766 = vpop.f32.mrf.mxu0
    %v767 = vadd.f32 %v754, %v766
    %v768 = vpop.f32.mrf.mxu0
    %769 = vdwg.mxu0
    %770 = vmatpush.bf16.msra.mxu0 %v503
    %771 = vmatpush.bf16.msra.mxu0 %v501
    %772 = vmatpush.bf16.msra.mxu0 %v499
    %773 = vmatpush.bf16.msra.mxu0 %v497
    %774 = vmatpush.bf16.msra.mxu0 %v495
    %775 = vmatpush.bf16.msra.mxu0 %v493
    %776 = vmatpush.bf16.msra.mxu0 %v491
    %777 = vmatpush.bf16.msra.mxu0 %v489
    %778 = vmatmul.bf16.gmra.mxu0 %v38
    %v779 = vpop.f32.mrf.mxu0
    %v780 = vadd.f32 %v767, %v779
    %v781 = vpop.f32.mrf.mxu0
    %782 = vdwg.mxu0
    %783 = vmatpush.bf16.msra.mxu0 %v519
    %784 = vmatpush.bf16.msra.mxu0 %v517
    %785 = vmatpush.bf16.msra.mxu0 %v515
    %786 = vmatpush.bf16.msra.mxu0 %v513
    %787 = vmatpush.bf16.msra.mxu0 %v511
    %788 = vmatpush.bf16.msra.mxu0 %v509
    %789 = vmatpush.bf16.msra.mxu0 %v507
    %790 = vmatpush.bf16.msra.mxu0 %v505
    %791 = vmatmul.bf16.gmra.mxu0 %v39
    %v792 = vpop.f32.mrf.mxu0
    %v793 = vadd.f32 %v780, %v792
    %v794 = vpop.f32.mrf.mxu0
    %795 = vdwg.mxu0
    %796 = vmatpush.bf16.msra.mxu0 %v535
    %797 = vmatpush.bf16.msra.mxu0 %v533
    %798 = vmatpush.bf16.msra.mxu0 %v531
    %799 = vmatpush.bf16.msra.mxu0 %v529
    %800 = vmatpush.bf16.msra.mxu0 %v527
    %801 = vmatpush.bf16.msra.mxu0 %v525
    %802 = vmatpush.bf16.msra.mxu0 %v523
    %803 = vmatpush.bf16.msra.mxu0 %v521
    %804 = vmatmul.bf16.gmra.mxu0 %v40
    %v805 = vpop.f32.mrf.mxu0
    %v806 = vadd.f32 %v793, %v805
    %v807 = vpop.f32.mrf.mxu0
    %808 = vdwg.mxu0
    %809 = vmatpush.bf16.msra.mxu0 0
    %810 = vmatpush.bf16.msra.mxu0 0
    %811 = vmatpush.bf16.msra.mxu0 0
    %812 = vmatpush.bf16.msra.mxu0 0
    %813 = vmatpush.bf16.msra.mxu0 0
    %814 = vmatpush.bf16.msra.mxu0 0
    %815 = vmatpush.bf16.msra.mxu0 0
    %816 = vmatpush.bf16.msra.mxu0 %v537
    %817 = vmatmul.bf16.gmra.mxu0 %v638
    %v818 = vpop.f32.mrf.mxu0
    %v819 = vadd.f32 %v806, %v818
    %v820 = vpop.f32.mrf.mxu0
    %821 = vdwg.mxu0
    %v822 = vmax.f32 %v728, 0.0
    %v823 = vmax.f32 %v819, 0.0
    %v824 = vpack.c.bf16 %v822, %v822
    %v825 = vpack.c.bf16 %v823, %v823
    %v826 = vld [vmem:[%s3] sm:$0xff]
    %v827 = vld [vmem:[%s3 + $0x8] sm:$0xff]
    %v828 = vld [vmem:[%s3 + $0x10] sm:$0xff]
    %v829 = vld [vmem:[%s3 + $0x18] sm:$0xff]
    %v830 = vld [vmem:[%s3 + $0x20] sm:$0xff]
    %v831 = vld [vmem:[%s3 + $0x28] sm:$0xff]
    %v832 = vld [vmem:[%s3 + $0x30] sm:$0xff]
    %v833 = vld [vmem:[%s3 + $0x38] sm:$0xff]
    %v834 = vld [vmem:[%s3 + $0x40] sm:$0xff]
    %v835 = vld [vmem:[%s3 + $0x48] sm:$0xff]
    %v836 = vld [vmem:[%s3 + $0x50] sm:$0xff]
    %v837 = vld [vmem:[%s3 + $0x58] sm:$0xff]
    %v838 = vld [vmem:[%s3 + $0x60] sm:$0xff]
    %v839 = vld [vmem:[%s3 + $0x68] sm:$0xff]
    %v840 = vld [vmem:[%s3 + $0x70] sm:$0xff]
    %v841 = vld [vmem:[%s3 + $0x78] sm:$0xff]
    %v842 = vld [vmem:[%s3 + $0x80] sm:$0xff]
    %v843 = vld [vmem:[%s3 + $0x88] sm:$0xff]
    %v844 = vld [vmem:[%s3 + $0x90] sm:$0xff]
    %v845 = vld [vmem:[%s3 + $0x98] sm:$0xff]
    %v846 = vld [vmem:[%s3 + $0xa0] sm:$0xff]
    %v847 = vld [vmem:[%s3 + $0xa8] sm:$0xff]
    %v848 = vld [vmem:[%s3 + $0xb0] sm:$0xff]
    %v849 = vld [vmem:[%s3 + $0xb8] sm:$0xff]
    %v850 = vld [vmem:[%s3 + $0xc0] sm:$0xff]
    %v851 = vld [vmem:[%s3 + $0xc8] sm:$0xff]
    %v852 = vld [vmem:[%s3 + $0xd0] sm:$0xff]
    %v853 = vld [vmem:[%s3 + $0xd8] sm:$0xff]
    %v854 = vld [vmem:[%s3 + $0xe0] sm:$0xff]
    %v855 = vld [vmem:[%s3 + $0xe8] sm:$0xff]
    %v856 = vld [vmem:[%s3 + $0xf0] sm:$0xff]
    %v857 = vld [vmem:[%s3 + $0xf8] sm:$0xff]
    %v858 = vld [vmem:[%s4] sm:$0x3]
    %v860 = vperm.slane %v858, 0
    %v861 = vperm.slane %v858, 1
    %v896 = vunpack.c.l.b16 %v826
    %v897 = vunpack.c.h.b16 %v826
    %v898 = vunpack.c.l.b16 %v827
    %v899 = vunpack.c.h.b16 %v827
    %v900 = vunpack.c.l.b16 %v828
    %v901 = vunpack.c.h.b16 %v828
    %v902 = vunpack.c.l.b16 %v829
    %v903 = vunpack.c.h.b16 %v829
    %v904 = vunpack.c.l.b16 %v830
    %v905 = vunpack.c.h.b16 %v830
    %v906 = vunpack.c.l.b16 %v831
    %v907 = vunpack.c.h.b16 %v831
    %v908 = vunpack.c.l.b16 %v832
    %v909 = vunpack.c.h.b16 %v832
    %v910 = vunpack.c.l.b16 %v833
    %v911 = vunpack.c.h.b16 %v833
    %v912 = vunpack.c.l.b16 %v834
    %v913 = vunpack.c.h.b16 %v834
    %v914 = vunpack.c.l.b16 %v835
    %v915 = vunpack.c.h.b16 %v835
    %v916 = vunpack.c.l.b16 %v836
    %v917 = vunpack.c.h.b16 %v836
    %v918 = vunpack.c.l.b16 %v837
    %v919 = vunpack.c.h.b16 %v837
    %v920 = vunpack.c.l.b16 %v838
    %v921 = vunpack.c.h.b16 %v838
    %v922 = vunpack.c.l.b16 %v839
    %v923 = vunpack.c.h.b16 %v839
    %v924 = vunpack.c.l.b16 %v840
    %v925 = vunpack.c.h.b16 %v840
    %v926 = vunpack.c.l.b16 %v841
    %v927 = vunpack.c.h.b16 %v841
    %v928 = vunpack.c.l.b16 %v842
    %v929 = vunpack.c.h.b16 %v842
    %v930 = vunpack.c.l.b16 %v843
    %v931 = vunpack.c.h.b16 %v843
    %v932 = vunpack.c.l.b16 %v844
    %v933 = vunpack.c.h.b16 %v844
    %v934 = vunpack.c.l.b16 %v845
    %v935 = vunpack.c.h.b16 %v845
    %v936 = vunpack.c.l.b16 %v846
    %v937 = vunpack.c.h.b16 %v846
    %v938 = vunpack.c.l.b16 %v847
    %v939 = vunpack.c.h.b16 %v847
    %v940 = vunpack.c.l.b16 %v848
    %v941 = vunpack.c.h.b16 %v848
    %v942 = vunpack.c.l.b16 %v849
    %v943 = vunpack.c.h.b16 %v849
    %v944 = vunpack.c.l.b16 %v850
    %v945 = vunpack.c.h.b16 %v850
    %v946 = vunpack.c.l.b16 %v851
    %v947 = vunpack.c.h.b16 %v851
    %v948 = vunpack.c.l.b16 %v852
    %v949 = vunpack.c.h.b16 %v852
    %v950 = vunpack.c.l.b16 %v853
    %v951 = vunpack.c.h.b16 %v853
    %v952 = vunpack.c.l.b16 %v854
    %v953 = vunpack.c.h.b16 %v854
    %v954 = vunpack.c.l.b16 %v855
    %v955 = vunpack.c.h.b16 %v855
    %v956 = vunpack.c.l.b16 %v856
    %v957 = vunpack.c.h.b16 %v856
    %v958 = vunpack.c.l.b16 %v857
    %v959 = vunpack.c.h.b16 %v857
    %v960 = vpack.c.b16 %v898, %v896
    %v961 = vpack.c.b16 %v899, %v897
    %v962 = vpack.c.b16 %v902, %v900
    %v963 = vpack.c.b16 %v903, %v901
    %v964 = vpack.c.b16 %v906, %v904
    %v965 = vpack.c.b16 %v907, %v905
    %v966 = vpack.c.b16 %v910, %v908
    %v967 = vpack.c.b16 %v911, %v909
    %v968 = vpack.c.b16 %v914, %v912
    %v969 = vpack.c.b16 %v915, %v913
    %v970 = vpack.c.b16 %v918, %v916
    %v971 = vpack.c.b16 %v919, %v917
    %v972 = vpack.c.b16 %v922, %v920
    %v973 = vpack.c.b16 %v923, %v921
    %v974 = vpack.c.b16 %v926, %v924
    %v975 = vpack.c.b16 %v927, %v925
    %v976 = vpack.c.b16 %v930, %v928
    %v977 = vpack.c.b16 %v931, %v929
    %v978 = vpack.c.b16 %v934, %v932
    %v979 = vpack.c.b16 %v935, %v933
    %v980 = vpack.c.b16 %v938, %v936
    %v981 = vpack.c.b16 %v939, %v937
    %v982 = vpack.c.b16 %v942, %v940
    %v983 = vpack.c.b16 %v943, %v941
    %v984 = vpack.c.b16 %v946, %v944
    %v985 = vpack.c.b16 %v947, %v945
    %v986 = vpack.c.b16 %v950, %v948
    %v987 = vpack.c.b16 %v951, %v949
    %v988 = vpack.c.b16 %v954, %v952
    %v989 = vpack.c.b16 %v955, %v953
    %v990 = vpack.c.b16 %v958, %v956
    %v991 = vpack.c.b16 %v959, %v957
    %1024 = vmatpush.bf16.msra.mxu0 %v974
    %1025 = vmatpush.bf16.msra.mxu0 %v972
    %1026 = vmatpush.bf16.msra.mxu0 %v970
    %1027 = vmatpush.bf16.msra.mxu0 %v968
    %1028 = vmatpush.bf16.msra.mxu0 %v966
    %1029 = vmatpush.bf16.msra.mxu0 %v964
    %1030 = vmatpush.bf16.msra.mxu0 %v962
    %1031 = vmatpush.bf16.msra.mxu0 %v960
    %1032 = vmatmul.bf16.gmra.mxu0 %v824
    %v1033 = vpop.f32.mrf.mxu0
    %v1034 = vadd.f32 %v860, %v1033
    %v1035 = vpop.f32.mrf.mxu0
    %1036 = vdwg.mxu0
    %1037 = vmatpush.bf16.msra.mxu0 %v990
    %1038 = vmatpush.bf16.msra.mxu0 %v988
    %1039 = vmatpush.bf16.msra.mxu0 %v986
    %1040 = vmatpush.bf16.msra.mxu0 %v984
    %1041 = vmatpush.bf16.msra.mxu0 %v982
    %1042 = vmatpush.bf16.msra.mxu0 %v980
    %1043 = vmatpush.bf16.msra.mxu0 %v978
    %1044 = vmatpush.bf16.msra.mxu0 %v976
    %1045 = vmatmul.bf16.gmra.mxu0 %v825
    %v1046 = vpop.f32.mrf.mxu0
    %v1047 = vadd.f32 %v1034, %v1046
    %v1048 = vpop.f32.mrf.mxu0
    %1049 = vdwg.mxu0
    %1050 = vmatpush.bf16.msra.mxu0 %v975
    %1051 = vmatpush.bf16.msra.mxu0 %v973
    %1052 = vmatpush.bf16.msra.mxu0 %v971
    %1053 = vmatpush.bf16.msra.mxu0 %v969
    %1054 = vmatpush.bf16.msra.mxu0 %v967
    %1055 = vmatpush.bf16.msra.mxu0 %v965
    %1056 = vmatpush.bf16.msra.mxu0 %v963
    %1057 = vmatpush.bf16.msra.mxu0 %v961
    %1058 = vmatmul.bf16.gmra.mxu0 %v824
    %v1059 = vpop.f32.mrf.mxu0
    %v1060 = vadd.f32 %v861, %v1059
    %v1061 = vpop.f32.mrf.mxu0
    %1062 = vdwg.mxu0
    %1063 = vmatpush.bf16.msra.mxu0 %v991
    %1064 = vmatpush.bf16.msra.mxu0 %v989
    %1065 = vmatpush.bf16.msra.mxu0 %v987
    %1066 = vmatpush.bf16.msra.mxu0 %v985
    %1067 = vmatpush.bf16.msra.mxu0 %v983
    %1068 = vmatpush.bf16.msra.mxu0 %v981
    %1069 = vmatpush.bf16.msra.mxu0 %v979
    %1070 = vmatpush.bf16.msra.mxu0 %v977
    %1071 = vmatmul.bf16.gmra.mxu0 %v825
    %v1072 = vpop.f32.mrf.mxu0
    %v1073 = vadd.f32 %v1060, %v1072
    %v1074 = vpop.f32.mrf.mxu0
    %1075 = vdwg.mxu0
    %v1076 = vmax.f32 %v1047, 0.0
    %v1077 = vmax.f32 %v1073, 0.0
    %v1078 = vpack.c.bf16 %v1076, %v1076
    %v1079 = vpack.c.bf16 %v1077, %v1077
    %v1080 = vld [vmem:[%s5] sm:$0xf]
    %v1081 = vld [vmem:[%s5 + $0x4] sm:$0xf]
    %v1082 = vld [vmem:[%s5 + $0x8] sm:$0xf]
    %v1083 = vld [vmem:[%s5 + $0xc] sm:$0xf]
    %v1084 = vld [vmem:[%s5 + $0x10] sm:$0xf]
    %v1085 = vld [vmem:[%s5 + $0x14] sm:$0xf]
    %v1086 = vld [vmem:[%s5 + $0x18] sm:$0xf]
    %v1087 = vld [vmem:[%s5 + $0x1c] sm:$0xf]
    %v1088 = vld [vmem:[%s5 + $0x20] sm:$0xf]
    %v1089 = vld [vmem:[%s5 + $0x24] sm:$0xf]
    %v1090 = vld [vmem:[%s5 + $0x28] sm:$0xf]
    %v1091 = vld [vmem:[%s5 + $0x2c] sm:$0xf]
    %v1092 = vld [vmem:[%s5 + $0x30] sm:$0xf]
    %v1093 = vld [vmem:[%s5 + $0x34] sm:$0xf]
    %v1094 = vld [vmem:[%s5 + $0x38] sm:$0xf]
    %v1095 = vld [vmem:[%s5 + $0x3c] sm:$0xf]
    %v1096 = vld [vmem:[%s5 + $0x40] sm:$0xf]
    %v1097 = vld [vmem:[%s5 + $0x44] sm:$0xf]
    %v1098 = vld [vmem:[%s5 + $0x48] sm:$0xf]
    %v1099 = vld [vmem:[%s5 + $0x4c] sm:$0xf]
    %v1100 = vld [vmem:[%s5 + $0x50] sm:$0xf]
    %v1101 = vld [vmem:[%s5 + $0x54] sm:$0xf]
    %v1102 = vld [vmem:[%s5 + $0x58] sm:$0xf]
    %v1103 = vld [vmem:[%s5 + $0x5c] sm:$0xf]
    %v1104 = vld [vmem:[%s5 + $0x60] sm:$0xf]
    %v1105 = vld [vmem:[%s5 + $0x64] sm:$0xf]
    %v1106 = vld [vmem:[%s5 + $0x68] sm:$0xf]
    %v1107 = vld [vmem:[%s5 + $0x6c] sm:$0xf]
    %v1108 = vld [vmem:[%s5 + $0x70] sm:$0xf]
    %v1109 = vld [vmem:[%s5 + $0x74] sm:$0xf]
    %v1110 = vld [vmem:[%s5 + $0x78] sm:$0xf]
    %v1111 = vld [vmem:[%s5 + $0x7c] sm:$0xf]
    %v1112 = vld [vmem:[%s6] sm:$0x1]
    %v1114 = vperm.slane %v1112, 0
    %v1148 = vunpack.c.l.b16 %v1080
    %v1149 = vunpack.c.l.b16 %v1081
    %v1150 = vunpack.c.l.b16 %v1082
    %v1151 = vunpack.c.l.b16 %v1083
    %v1152 = vunpack.c.l.b16 %v1084
    %v1153 = vunpack.c.l.b16 %v1085
    %v1154 = vunpack.c.l.b16 %v1086
    %v1155 = vunpack.c.l.b16 %v1087
    %v1156 = vunpack.c.l.b16 %v1088
    %v1157 = vunpack.c.l.b16 %v1089
    %v1158 = vunpack.c.l.b16 %v1090
    %v1159 = vunpack.c.l.b16 %v1091
    %v1160 = vunpack.c.l.b16 %v1092
    %v1161 = vunpack.c.l.b16 %v1093
    %v1162 = vunpack.c.l.b16 %v1094
    %v1163 = vunpack.c.l.b16 %v1095
    %v1164 = vunpack.c.l.b16 %v1096
    %v1165 = vunpack.c.l.b16 %v1097
    %v1166 = vunpack.c.l.b16 %v1098
    %v1167 = vunpack.c.l.b16 %v1099
    %v1168 = vunpack.c.l.b16 %v1100
    %v1169 = vunpack.c.l.b16 %v1101
    %v1170 = vunpack.c.l.b16 %v1102
    %v1171 = vunpack.c.l.b16 %v1103
    %v1172 = vunpack.c.l.b16 %v1104
    %v1173 = vunpack.c.l.b16 %v1105
    %v1174 = vunpack.c.l.b16 %v1106
    %v1175 = vunpack.c.l.b16 %v1107
    %v1176 = vunpack.c.l.b16 %v1108
    %v1177 = vunpack.c.l.b16 %v1109
    %v1178 = vunpack.c.l.b16 %v1110
    %v1179 = vunpack.c.l.b16 %v1111
    %v1180 = vpack.c.b16 %v1149, %v1148
    %v1181 = vpack.c.b16 %v1151, %v1150
    %v1182 = vpack.c.b16 %v1153, %v1152
    %v1183 = vpack.c.b16 %v1155, %v1154
    %v1184 = vpack.c.b16 %v1157, %v1156
    %v1185 = vpack.c.b16 %v1159, %v1158
    %v1186 = vpack.c.b16 %v1161, %v1160
    %v1187 = vpack.c.b16 %v1163, %v1162
    %v1188 = vpack.c.b16 %v1165, %v1164
    %v1189 = vpack.c.b16 %v1167, %v1166
    %v1190 = vpack.c.b16 %v1169, %v1168
    %v1191 = vpack.c.b16 %v1171, %v1170
    %v1192 = vpack.c.b16 %v1173, %v1172
    %v1193 = vpack.c.b16 %v1175, %v1174
    %v1194 = vpack.c.b16 %v1177, %v1176
    %v1195 = vpack.c.b16 %v1179, %v1178
    %1212 = vmatpush.bf16.msra.mxu0 %v1187
    %1213 = vmatpush.bf16.msra.mxu0 %v1186
    %1214 = vmatpush.bf16.msra.mxu0 %v1185
    %1215 = vmatpush.bf16.msra.mxu0 %v1184
    %1216 = vmatpush.bf16.msra.mxu0 %v1183
    %1217 = vmatpush.bf16.msra.mxu0 %v1182
    %1218 = vmatpush.bf16.msra.mxu0 %v1181
    %1219 = vmatpush.bf16.msra.mxu0 %v1180
    %1220 = vmatmul.bf16.gmra.mxu0 %v1078
    %v1221 = vpop.f32.mrf.mxu0
    %v1222 = vadd.f32 %v1114, %v1221
    %v1223 = vpop.f32.mrf.mxu0
    %1224 = vdwg.mxu0
    %1225 = vmatpush.bf16.msra.mxu0 %v1195
    %1226 = vmatpush.bf16.msra.mxu0 %v1194
    %1227 = vmatpush.bf16.msra.mxu0 %v1193
    %1228 = vmatpush.bf16.msra.mxu0 %v1192
    %1229 = vmatpush.bf16.msra.mxu0 %v1191
    %1230 = vmatpush.bf16.msra.mxu0 %v1190
    %1231 = vmatpush.bf16.msra.mxu0 %v1189
    %1232 = vmatpush.bf16.msra.mxu0 %v1188
    %1233 = vmatmul.bf16.gmra.mxu0 %v1079
    %v1234 = vpop.f32.mrf.mxu0
    %v1235 = vadd.f32 %v1222, %v1234
    %v1236 = vpop.f32.mrf.mxu0
    %1237 = vdwg.mxu0
    %1238 = vst [vmem:[#allocation2] sm:$0xff] %v1235
    // Predicated region
    $region30: #{net_forward.1} parent=1 // pred_check
      _
    $region31: #{net_forward.1} parent=1 // pred_check_branch
      %1240 = sbr.rel (0) target = $region33
    $region32: #{net_forward.1} parent=1 // pred_region
      %1242 = vsyncadd [#allocation3], 0
      %s1244 = sshll.u32 [#allocation2], 4
      %s1245 = int_to_ptr.vmem [resolvable:$true] %s1244
      %s1246 = sshll.u32 %s7, 4
      %s1247 = int_to_ptr.hbm [resolvable:$true] %s1246
      %1249 = dma.vmem_to_hbm [thread:$0]  %s1245, 128, %s1247, [#allocation3]
    $region33: #{net_forward.1} parent=1 // pred_fallthru
      _
    // Predicated region
    $region34: #{net_forward.1} parent=1 // pred_check
      _
    $region35: #{net_forward.1} parent=1 // pred_check_branch
      %1251 = sbr.rel (0) target = $region37
    $region36: #{net_forward.1} parent=1 // pred_region
      %1253 = dma.done [#allocation3], 128
    $region37: #{net_forward.1} parent=1 // pred_fallthru
      _
    %1254 = vsyncpa [#allocation3], 1

</llo_original>
